<compile_context>
chip_gen: v6e
topology: v6e:2x2x1
jax: 0.10.0
libtpu: 0.0.40
codegen_flags: <defaults>
</compile_context>

<pallas_src>
import functools

import jax
import jax.numpy as jnp
from jax import lax
from jax.experimental import pallas as pl
from jax.experimental.pallas import tpu as pltpu


# --------------------------------------------------------------------------
# Kernels
# --------------------------------------------------------------------------

def _ls_onepass_kernel(x_ref, t_ref, out_ref, *, confidence, sm_off):
    """Row tile x full class dim: per-row smoothed NLL -> out_ref (TN, 1)."""
    x = x_ref[...]                                          # (TN, C) native dtype
    c = x.shape[-1]

    # max is exact in any float dtype; subtract in native dtype, upcast after
    m = jnp.max(x, axis=-1, keepdims=True)                  # (TN, 1)
    shifted = (x - m).astype(jnp.float32)                   # (TN, C) f32
    lse = jnp.log(jnp.sum(jnp.exp(shifted), axis=-1, keepdims=True))  # (TN, 1)

    # target pick via iota compare + where (no one-hot float tile, no extra mul)
    # TODO(synk): out-of-range targets silently contribute shifted_t == 0.
    lane = lax.broadcasted_iota(jnp.int32, shifted.shape, 1)
    shifted_t = jnp.sum(jnp.where(lane == t_ref[...], shifted, 0.0),
                        axis=-1, keepdims=True)             # (TN, 1)
    logp_t = shifted_t - lse

    if sm_off == 0.0:
        loss_row = -(confidence * logp_t)
    else:
        # sum_c log_prob = sum_c shifted - C * lse   (per row)
        sum_logp = jnp.sum(shifted, axis=-1, keepdims=True) - float(c) * lse
        loss_row = -(sm_off * sum_logp + (confidence - sm_off) * logp_t)

    out_ref[...] = loss_row


def _ls_streaming_kernel(x_ref, t_ref, out_ref, m_acc, s_acc, sx_acc, xt_acc,
                         *, confidence, sm_off, num_classes, tile_c):
    """C-tiled streaming log-sum-exp; finalizes per-row loss on last C block."""
    ci = pl.program_id(1)

    @pl.when(ci == 0)
    def _():
        m_acc[...] = jnp.full_like(m_acc, -jnp.inf)
        s_acc[...] = jnp.zeros_like(s_acc)
        sx_acc[...] = jnp.zeros_like(sx_acc)
        xt_acc[...] = jnp.zeros_like(xt_acc)

    x = x_ref[...].astype(jnp.float32)                      # (TN, TC)
    lane = lax.broadcasted_iota(jnp.int32, x.shape, 1) + ci * tile_c
    valid = lane < num_classes                              # mask padded edge lanes
    x_valid = jnp.where(valid, x, -jnp.inf)

    m_new = jnp.maximum(m_acc[...], jnp.max(x_valid, axis=-1, keepdims=True))
    alpha = jnp.exp(m_acc[...] - m_new)
    p_sum = jnp.sum(jnp.exp(x_valid - m_new), axis=-1, keepdims=True)
    s_acc[...] = alpha * s_acc[...] + p_sum
    m_acc[...] = m_new
    sx_acc[...] += jnp.sum(jnp.where(valid, x, 0.0), axis=-1, keepdims=True)
    xt_acc[...] += jnp.sum(jnp.where(lane == t_ref[...], x, 0.0),
                           axis=-1, keepdims=True)

    @pl.when(ci == pl.num_programs(1) - 1)
    def _():
        lse = m_acc[...] + jnp.log(s_acc[...])
        logp_t = xt_acc[...] - lse
        if sm_off == 0.0:
            loss_row = -(confidence * logp_t)
        else:
            sum_logp = sx_acc[...] - float(num_classes) * lse
            loss_row = -(sm_off * sum_logp + (confidence - sm_off) * logp_t)
        out_ref[...] = loss_row


# --------------------------------------------------------------------------
# Tile sizing (generation-aware)
# --------------------------------------------------------------------------

_BLOCK_CAP = 8 << 20          # target native-dtype logits block per step
_MAX_ROWS = 2048


def _tpu_vmem_bytes():
    """Physical VMEM of the current TPU generation (fallback: v7x's 64 MiB)."""
    try:
        info = pltpu.get_tpu_info()
        v = getattr(info, "vmem_capacity_bytes", None)
        if v:
            return int(v)
    except Exception:
        pass
    return 64 << 20


def _pick_tiles(n, c, itemsize, tile_n=None, tile_c=None):
    phys = _tpu_vmem_bytes()
    # scoped limit we request; leave headroom for compiler-internal scratch
    vmem_limit = min(int(phys * 0.8), 100 << 20)
    row_mult = 16 if itemsize < 4 else 8          # bf16 packs 16 rows / vreg
    # per-element VMEM per grid step: double-buffered native-dtype logits
    # block + ~5 full-tile f32 temporaries (shifted, exp, iota, where, reduce)
    per_elem = 2 * itemsize + 5 * 4
    n_pad = -(-n // row_mult) * row_mult

    if tile_c is not None and tile_c >= c:
        tile_c = None
    if tile_c is None:
        # one-pass (full class dim) if even the minimum row tile fits budgets
        if (row_mult * c * itemsize <= _BLOCK_CAP
                and row_mult * c * per_elem <= vmem_limit):
            tile_c = c
        else:
            max_c_blocks = min(_BLOCK_CAP // (row_mult * 128 * itemsize),
                               vmem_limit // (row_mult * 128 * per_elem))
            tile_c = 128 * max(1, min(-(-c // 128), int(max_c_blocks)))

    eff_c = min(tile_c, c)
    if tile_n is None:
        tile_n = min(_MAX_ROWS,
                     _BLOCK_CAP // max(1, eff_c * itemsize),
                     vmem_limit // max(1, eff_c * per_elem),
                     n_pad)
        tile_n = max(row_mult, (tile_n // row_mult) * row_mult)
        # prefer >= 2 row-grid steps so both TensorCores get work on v7x
        if tile_n >= n_pad and n_pad >= 2 * row_mult:
            groups = n_pad // row_mult
            tile_n = -(-groups // 2) * row_mult
    return int(tile_n), int(tile_c), int(vmem_limit)


# --------------------------------------------------------------------------
# Wrapper
# --------------------------------------------------------------------------

def label_smoothing_loss(logits, targets, classes=None, smoothing=0.0,
                         tile_n=None, tile_c=None):
    """logits: (N, C) float (f32 or bf16); targets: (N,) int.

    Returns scalar f32 equal to
        mean_i sum_c -true_dist[i, c] * log_softmax(logits)[i, c]
    with true_dist = smoothing/(classes-1) off-target and `confidence` at the
    target class (matches PyTorch LabelSmoothingLoss.forward).
    """
    N, C = logits.shape
    if classes is None:
        classes = C
    confidence = 1.0 - float(smoothing)
    # classes == 1 with smoothing > 0 would divide by zero in the reference;
    # here it degenerates to sm_off = 0 (plain scaled NLL).
    sm_off = float(smoothing) / float(classes - 1) if classes > 1 else 0.0
    itemsize = jnp.dtype(logits.dtype).itemsize

    tn, tc, vmem_limit = _pick_tiles(N, C, itemsize, tile_n, tile_c)
    t2d = targets.astype(jnp.int32).reshape(N, 1)
    n_row = pl.cdiv(N, tn)
    out_shape = jax.ShapeDtypeStruct((N, 1), jnp.float32)

    if tc >= C:
        kernel = functools.partial(_ls_onepass_kernel,
                                   confidence=confidence, sm_off=sm_off)
        per_row = pl.pallas_call(
            kernel,
            out_shape=out_shape,
            grid_spec=pltpu.PrefetchScalarGridSpec(
                num_scalar_prefetch=0,
                grid=(n_row,),
                in_specs=[
                    pl.BlockSpec((tn, C), lambda i: (i, 0)),   # logits tile
                    pl.BlockSpec((tn, 1), lambda i: (i, 0)),   # target tile
                ],
                out_specs=pl.BlockSpec((tn, 1), lambda i: (i, 0)),
            ),
            compiler_params=pltpu.CompilerParams(
                dimension_semantics=("parallel",),
                vmem_limit_bytes=vmem_limit),
        )(logits, t2d)
    else:
        n_c = pl.cdiv(C, tc)
        kernel = functools.partial(_ls_streaming_kernel,
                                   confidence=confidence, sm_off=sm_off,
                                   num_classes=C, tile_c=tc)
        per_row = pl.pallas_call(
            kernel,
            out_shape=out_shape,
            grid_spec=pltpu.PrefetchScalarGridSpec(
                num_scalar_prefetch=0,
                grid=(n_row, n_c),
                in_specs=[
                    pl.BlockSpec((tn, tc), lambda i, ci: (i, ci)),  # logits tile
                    pl.BlockSpec((tn, 1), lambda i, ci: (i, 0)),    # target tile
                ],
                out_specs=pl.BlockSpec((tn, 1), lambda i, ci: (i, 0)),
                scratch_shapes=[pltpu.VMEM((tn, 1), jnp.float32)] * 4,
            ),
            compiler_params=pltpu.CompilerParams(
                dimension_semantics=("parallel", "arbitrary"),
                vmem_limit_bytes=vmem_limit),
        )(logits, t2d)

    # tiny final reduction + mean in XLA (N floats)
    return jnp.sum(per_row[:, 0]) / N


def label_smoothing_loss_ref(pred, target, classes, smoothing):
    """Pure-JAX reference mirroring the PyTorch module."""
    confidence = 1.0 - smoothing
    logp = jax.nn.log_softmax(pred.astype(jnp.float32), axis=-1)
    true_dist = jnp.full_like(logp, smoothing / (classes - 1))
    true_dist = true_dist.at[jnp.arange(pred.shape[0]), target].set(confidence)
    return jnp.mean(jnp.sum(-true_dist * logp, axis=-1))


if __name__ == "__main__":
    key = jax.random.PRNGKey(0)
    k1, k2, k3, k4 = jax.random.split(key, 4)
    smoothing = 0.1

    # --- small one-pass case (full class dim in a single block) ---
    N1, C1 = 16, 5
    logits1 = jax.random.normal(k1, (N1, C1), jnp.float32)
    targets1 = jax.random.randint(k2, (N1,), 0, C1, jnp.int32)
    out1 = label_smoothing_loss(logits1, targets1, classes=C1, smoothing=smoothing)
    out1 = jax.block_until_ready(out1)
    ref1 = label_smoothing_loss_ref(logits1, targets1, C1, smoothing)
    assert jnp.allclose(out1, ref1, rtol=1e-5, atol=1e-5), (out1, ref1)

    # --- small forced-streaming case (exercises the C-tiled LSE path,
    #     including the padded-lane mask since 320 % 128 != 0) ---
    N2, C2 = 24, 320
    logits2 = jax.random.normal(k3, (N2, C2), jnp.float32)
    targets2 = jax.random.randint(k4, (N2,), 0, C2, jnp.int32)
    out2 = label_smoothing_loss(logits2, targets2, classes=C2,
                                smoothing=smoothing, tile_c=128)
    out2 = jax.block_until_ready(out2)
    ref2 = label_smoothing_loss_ref(logits2, targets2, C2, smoothing)
    assert jnp.allclose(out2, ref2, rtol=1e-4, atol=1e-5), (out2, ref2)

    print("KERNEL_OK")
</pallas_src>

<mosaic_0001>
module attributes {stable_mosaic.version = 11 : i64} {
  func.func @_ls_onepass_kernel(%arg0: i32, %arg1: memref<8x5xf32, #tpu.memory_space<vmem>>, %arg2: memref<8x1xi32, #tpu.memory_space<vmem>>, %arg3: memref<8x1xf32, #tpu.memory_space<vmem>>) attributes {dimension_semantics = [#tpu.dimension_semantics<parallel>], iteration_bounds = array<i64: 2>, scalar_prefetch = 0 : i64, scratch_operands = 0 : i64, tpu.core_type = #tpu.core_type<tc>, window_params = [{transform_indices = @transform_0, window_bounds = array<i64: 8, 5>}, {transform_indices = @transform_1, window_bounds = array<i64: 8, 1>}, {transform_indices = @transform_2, window_bounds = array<i64: 8, 1>}]} {
    %c0 = arith.constant 0 : index
    %c0_0 = arith.constant 0 : index
    %0 = vector.load %arg1[%c0, %c0_0] : memref<8x5xf32, #tpu.memory_space<vmem>>, vector<8x5xf32>
    %cst = arith.constant dense<0xFF800000> : vector<8xf32>
    %1 = vector.multi_reduction <maximumf>, %0, %cst [1] : vector<8x5xf32> to vector<8xf32>
    %2 = vector.shape_cast %1 : vector<8xf32> to vector<8x1xf32>
    %3 = vector.broadcast %2 : vector<8x1xf32> to vector<8x5xf32>
    %4 = arith.subf %0, %3 : vector<8x5xf32>
    %5 = math.exp %4 : vector<8x5xf32>
    %cst_1 = arith.constant dense<0.000000e+00> : vector<8xf32>
    %6 = vector.multi_reduction <add>, %5, %cst_1 [1] : vector<8x5xf32> to vector<8xf32>
    %7 = vector.shape_cast %6 : vector<8xf32> to vector<8x1xf32>
    %8 = math.log %7 : vector<8x1xf32>
    %9 = tpu.iota {dimensions = array<i32: 1>} : vector<8x5xi32>
    %c0_2 = arith.constant 0 : index
    %c0_3 = arith.constant 0 : index
    %10 = vector.load %arg2[%c0_2, %c0_3] : memref<8x1xi32, #tpu.memory_space<vmem>>, vector<8x1xi32>
    %11 = vector.broadcast %10 : vector<8x1xi32> to vector<8x5xi32>
    %12 = arith.cmpi eq, %9, %11 : vector<8x5xi32>
    %cst_4 = arith.constant 0.000000e+00 : f32
    %13 = vector.broadcast %cst_4 : f32 to vector<8x5xf32>
    %14 = arith.select %12, %4, %13 : vector<8x5xi1>, vector<8x5xf32>
    %cst_5 = arith.constant dense<0.000000e+00> : vector<8xf32>
    %15 = vector.multi_reduction <add>, %14, %cst_5 [1] : vector<8x5xf32> to vector<8xf32>
    %16 = vector.shape_cast %15 : vector<8xf32> to vector<8x1xf32>
    %17 = arith.subf %16, %8 : vector<8x1xf32>
    %cst_6 = arith.constant dense<0.000000e+00> : vector<8xf32>
    %18 = vector.multi_reduction <add>, %4, %cst_6 [1] : vector<8x5xf32> to vector<8xf32>
    %19 = vector.shape_cast %18 : vector<8xf32> to vector<8x1xf32>
    %cst_7 = arith.constant 5.000000e+00 : f32
    %20 = vector.broadcast %cst_7 : f32 to vector<8x1xf32>
    %21 = arith.mulf %20, %8 : vector<8x1xf32>
    %22 = arith.subf %19, %21 : vector<8x1xf32>
    %cst_8 = arith.constant 2.500000e-02 : f32
    %23 = vector.broadcast %cst_8 : f32 to vector<8x1xf32>
    %24 = arith.mulf %23, %22 : vector<8x1xf32>
    %cst_9 = arith.constant 8.750000e-01 : f32
    %25 = vector.broadcast %cst_9 : f32 to vector<8x1xf32>
    %26 = arith.mulf %25, %17 : vector<8x1xf32>
    %27 = arith.addf %24, %26 : vector<8x1xf32>
    %cst_10 = arith.constant 0.000000e+00 : f32
    %28 = vector.broadcast %cst_10 : f32 to vector<8x1xf32>
    %29 = arith.subf %28, %27 : vector<8x1xf32>
    %c0_11 = arith.constant 0 : index
    %c0_12 = arith.constant 0 : index
    %30 = vector.load %arg3[%c0_11, %c0_12] : memref<8x1xf32, #tpu.memory_space<vmem>>, vector<8x1xf32>
    tpu.vector_store %arg3[%c0_11, %c0_12], %29 {strides = array<i32>} : memref<8x1xf32, #tpu.memory_space<vmem>>, vector<8x1xf32>,
    return
  }
  func.func @transform_0(%arg0: i32) -> (i32, i32) {
    %c0_i32 = arith.constant 0 : i32
    %c0_i32_0 = arith.constant 0 : i32
    return %arg0, %c0_i32 : i32, i32
  }
  func.func @transform_1(%arg0: i32) -> (i32, i32) {
    %c0_i32 = arith.constant 0 : i32
    %c0_i32_0 = arith.constant 0 : i32
    return %arg0, %c0_i32 : i32, i32
  }
  func.func @transform_2(%arg0: i32) -> (i32, i32) {
    %c0_i32 = arith.constant 0 : i32
    %c0_i32_0 = arith.constant 0 : i32
    return %arg0, %c0_i32 : i32, i32
  }
}

</mosaic_0001>

<llo_original>
// kernel: tpu_custom_call.1
$region0: #{tpu_custom_call.1}
  #allocation0 [shape = 'u32[]', space=smem, size = 0x4, offset = 0x4, fixed_abs, tag = 'smem constant byte address 0x4 - core index']
  #allocation1 [shape = 'u32[144,128]{1,0:T(1,128)}', space=vmem, size = 0x12000, scoped, tag = 'internal scratch']
  %s0 = inlined_call_operand.vmem [shape: f32[16,5], index: 0, kind: input, shape index: {}]
  %s1 = inlined_call_operand.vmem [shape: s32[16,1], index: 1, kind: input, shape index: {}]
  %s2 = inlined_call_operand.vmem [shape: f32[16,1], index: 2, kind: output, shape index: {}]
  %s3 = sld [smem:[#allocation0]]
  $region41: #{tpu_custom_call.1} parent=0
    _
  %s5 = ssub.s32 1, %s3
  %s6 = scalar_select 0, %s5, %s3
  loop: start=0, step=1, limit=4
  $region2: #{tpu_custom_call.1} parent=0 // loop_pre_header
    _
  $region3: #{tpu_custom_call.1} parent=0 // loop_header
    %s8 = sphi 0, %s12
    %p9 = scmp.ge.s32.totalorder %s8, 4
    %s18 = sphi 0, %s20
    %s21 = sphi 0, %s18
    %s22 = sphi 0, %s21
    %s38 = sphi 0, %s22
    %s44 = sphi 0, %s46
    %s47 = sphi 0, %s44
    %s48 = sphi 0, %s47
    %s64 = sphi 0, %s48
    %s70 = sphi 0, %s72
    %s73 = sphi 0, %s70
    %s74 = sphi 0, %s73
    %s90 = sphi 0, %s74
  $region4: #{tpu_custom_call.1} parent=0 // loop_header_branch
    %11 = sbr.rel (%p9) target = $region8
  $region5: #{tpu_custom_call.1} parent=0 // loop_body
    %s13 = ssub.s32 %s8, 1
    %s14 = ssub.s32 %s8, 2
    %s15 = sadd.s32 %s8, 1
    %s16 = ssub.s32 %s8, %s15
    %p17 = scmp.eq.s32.totalorder %s16, 0
    %s19 = sadd.s32 %s18, 1
    %s20 = scalar_select %p17, %s18, %s19
    %p23 = pneg %p17
    %p24 = scmp.eq.s32.totalorder %s8, 1
    %p25 = por %p23, %p24
    %p26 = scmp.ne.s32.totalorder %s18, %s21
    %p27 = scmp.eq.s32.totalorder %s8, 0
    %p28 = por %p26, %p27
    %p29 = scmp.ne.s32.totalorder %s18, %s21
    %p30 = scmp.eq.s32.totalorder %s13, 1
    %p31 = por %p29, %p30
    %p32 = scmp.ne.s32.totalorder %s21, %s22
    %p33 = scmp.eq.s32.totalorder %s13, 0
    %p34 = por %p32, %p33
    %p35 = scmp.ne.s32.totalorder %s21, %s22
    %p36 = scmp.eq.s32.totalorder %s14, 1
    %p37 = por %p35, %p36
    %p39 = scmp.ne.s32.totalorder %s22, %s38
    %p40 = scmp.eq.s32.totalorder %s14, 0
    %p41 = por %p39, %p40
    %s42 = ssub.s32 %s8, %s15
    %p43 = scmp.eq.s32.totalorder %s42, 0
    %s45 = sadd.s32 %s44, 1
    %s46 = scalar_select %p43, %s44, %s45
    %p49 = pneg %p43
    %p50 = scmp.eq.s32.totalorder %s8, 1
    %p51 = por %p49, %p50
    %p52 = scmp.ne.s32.totalorder %s44, %s47
    %p53 = scmp.eq.s32.totalorder %s8, 0
    %p54 = por %p52, %p53
    %p55 = scmp.ne.s32.totalorder %s44, %s47
    %p56 = scmp.eq.s32.totalorder %s13, 1
    %p57 = por %p55, %p56
    %p58 = scmp.ne.s32.totalorder %s47, %s48
    %p59 = scmp.eq.s32.totalorder %s13, 0
    %p60 = por %p58, %p59
    %p61 = scmp.ne.s32.totalorder %s47, %s48
    %p62 = scmp.eq.s32.totalorder %s14, 1
    %p63 = por %p61, %p62
    %p65 = scmp.ne.s32.totalorder %s48, %s64
    %p66 = scmp.eq.s32.totalorder %s14, 0
    %p67 = por %p65, %p66
    %s68 = ssub.s32 %s8, %s15
    %p69 = scmp.eq.s32.totalorder %s68, 0
    %s71 = sadd.s32 %s70, 1
    %s72 = scalar_select %p69, %s70, %s71
    %p75 = pneg %p69
    %p76 = scmp.eq.s32.totalorder %s8, 1
    %p77 = por %p75, %p76
    %p78 = scmp.ne.s32.totalorder %s70, %s73
    %p79 = scmp.eq.s32.totalorder %s8, 0
    %p80 = por %p78, %p79
    %p81 = scmp.ne.s32.totalorder %s70, %s73
    %p82 = scmp.eq.s32.totalorder %s13, 1
    %p83 = por %p81, %p82
    %p84 = scmp.ne.s32.totalorder %s73, %s74
    %p85 = scmp.eq.s32.totalorder %s13, 0
    %p86 = por %p84, %p85
    %p87 = scmp.ne.s32.totalorder %s73, %s74
    %p88 = scmp.eq.s32.totalorder %s14, 1
    %p89 = por %p87, %p88
    %p91 = scmp.ne.s32.totalorder %s74, %s90
    %p92 = scmp.eq.s32.totalorder %s14, 0
    %p93 = por %p91, %p92
    %p94 = scmp.le.s32.totalorder 1, %s8
    %p95 = scmp.lt.s32.totalorder %s8, 3
    %p96 = pnand %p94, %p95
    %p97 = pneg %p96
    // Predicated region
    $region9: #{tpu_custom_call.1} parent=5 // pred_check
      _
    $region10: #{tpu_custom_call.1} parent=5 // pred_check_branch
      %99 = sbr.rel (%p96) target = $region12
    $region11: #{tpu_custom_call.1} parent=5 // pred_region
      %s100 = ssub.s32 %s8, 1
    $region12: #{tpu_custom_call.1} parent=5 // pred_fallthru
      _
    %p101 = scmp.lt.s32.totalorder %s8, 2
    // Predicated region
    $region13: #{tpu_custom_call.1} parent=5 // pred_check
      %p102 = pneg %p101
    $region14: #{tpu_custom_call.1} parent=5 // pred_check_branch
      %104 = sbr.rel (%p102) target = $region16
    $region15: #{tpu_custom_call.1} parent=5 // pred_region
      // Predicated region
      $region17: #{tpu_custom_call.1} parent=15 // pred_check
        %p105 = pneg %p28
      $region18: #{tpu_custom_call.1} parent=15 // pred_check_branch
        %107 = sbr.rel (%p105) target = $region20
      $region19: #{tpu_custom_call.1} parent=15 // pred_region
        %p108 = scmp.lt.s32.totalorder %s8, 1
        %s109 = scalar_select %p108, %s8, 1
        %s110 = smul.addr %s109, 8
        %s111 = scalar_lea.vmem %s0, %s110
      $region20: #{tpu_custom_call.1} parent=15 // pred_fallthru
        _
      // Predicated region
      $region21: #{tpu_custom_call.1} parent=15 // pred_check
        %p112 = pneg %p54
      $region22: #{tpu_custom_call.1} parent=15 // pred_check_branch
        %114 = sbr.rel (%p112) target = $region24
      $region23: #{tpu_custom_call.1} parent=15 // pred_region
        %p115 = scmp.lt.s32.totalorder %s8, 1
        %s116 = scalar_select %p115, %s8, 1
        %s117 = smul.addr %s116, 8
        %s118 = scalar_lea.vmem %s1, %s117
      $region24: #{tpu_custom_call.1} parent=15 // pred_fallthru
        _
    $region16: #{tpu_custom_call.1} parent=5 // pred_fallthru
      _
    %p119 = scmp.le.s32.totalorder 1, %s8
    %p120 = scmp.lt.s32.totalorder %s8, 3
    %p121 = pnand %p119, %p120
    %p122 = pneg %p121
    // Predicated region
    $region25: #{tpu_custom_call.1} parent=5 // pred_check
      _
    $region26: #{tpu_custom_call.1} parent=5 // pred_check_branch
      %124 = sbr.rel (%p121) target = $region28
    $region27: #{tpu_custom_call.1} parent=5 // pred_region
      %s125 = ssub.s32 %s8, 1
      %p126 = scmp.lt.s32.totalorder %s13, 1
      %s127 = scalar_select %p126, %s13, 1
      %s128 = smul.addr %s127, 8
      %s129 = scalar_lea.vmem %s0, %s128
      %p130 = pneg %p34
      %p131 = pneg %p31
      %p132 = scmp.lt.s32.totalorder %s13, 1
      %s133 = scalar_select %p132, %s13, 1
      %s134 = smul.addr %s133, 8
      %s135 = scalar_lea.vmem %s1, %s134
      %p136 = pneg %p60
      %p137 = pneg %p57
      %p138 = pneg %p86
      %p139 = pneg %p83
      %p140 = scmp.lt.s32.totalorder %s13, 1
      %s141 = scalar_select %p140, %s13, 1
      %s142 = smul.addr %s141, 8
      %s143 = scalar_lea.vmem %s2, %s142
      %p144 = scmp.lt.s32.totalorder %s13, 1
      %s145 = scalar_select %p144, %s13, 1
      %s146 = smul.addr %s145, 8
      %s147 = scalar_lea.vmem %s0, %s146
      %p148 = scmp.lt.s32.totalorder %s13, 1
      %s149 = scalar_select %p148, %s13, 1
      %s150 = smul.addr %s149, 8
      %s151 = scalar_lea.vmem %s1, %s150
      %p152 = scmp.lt.s32.totalorder %s13, 1
      %s153 = scalar_select %p152, %s13, 1
      %s154 = smul.addr %s153, 8
      %s155 = scalar_lea.vmem %s2, %s154
      %v156 = vld [vmem:[%s147] sm:$0xff]
      %vm157 = vcmask 39936
      %v158 = vsel %vm157, %v156, -inf
      %159 = vmax.xlane.f32.xlu0 %v158
      %v160 = vpop.xlane.xlu0 %159
      %v161 = vsub.f32 %v156, %v160
      %v162 = vmul.f32 %v161, 1.442695
      %v163 = vpow.pop %v162
      %v164 = vsel %vm157, %v163, 0.0
      %165 = vadd.xlane.f32.xlu0 %v164
      %v166 = vpop.xlane.xlu0 %165
      %v167 = vlog2.pop %v166
      %v168 = vmul.f32 %v167, 0.6931472
      %v169 = vlaneseq
      %v170 = vand.u32 %v169, 127
      %v171 = vld [vmem:[%s151] sm:$0xff]
      %172 = vset.pattern.permute.xlu0 0
      %173 = vperm.xlu0 %172, %v171
      %v174 = vpop.permute.xlu0 %173
      %vm175 = vcmp.eq.s32.totalorder %v170, %v174
      %v176 = vsel %vm175, %v161, 0.0
      %v177 = vsel %vm157, %v176, 0.0
      %178 = vadd.xlane.f32.xlu0 %v177
      %v179 = vpop.xlane.xlu0 %178
      %v180 = vsub.f32 %v179, %v168
      %v181 = vsel %vm157, %v161, 0.0
      %182 = vadd.xlane.f32.xlu0 %v181
      %v183 = vpop.xlane.xlu0 %182
      %v184 = vmul.f32 %v168, 5.0
      %v185 = vsub.f32 %v183, %v184
      %v186 = vmul.f32 %v185, 0.025
      %v187 = vmul.f32 %v180, 0.875
      %v188 = vadd.f32 %v186, %v187
      %v189 = vsub.f32 0.0, %v188
      %vm190 = vcmask 7168
      %191 = vst.msk [vmem:[%s155] sm:$0xff] %vm190, %v189
      %p192 = scmp.lt.s32.totalorder %s13, 1
      %s193 = scalar_select %p192, %s13, 1
      %s194 = smul.addr %s193, 8
      %s195 = scalar_lea.vmem %s2, %s194
      // Predicated region
      $region29: #{tpu_custom_call.1} parent=27 // pred_check
        %p196 = pneg %p83
      $region30: #{tpu_custom_call.1} parent=27 // pred_check_branch
        %198 = sbr.rel (%p196) target = $region32
      $region31: #{tpu_custom_call.1} parent=27 // pred_region
        _
      $region32: #{tpu_custom_call.1} parent=27 // pred_fallthru
        _
    $region28: #{tpu_custom_call.1} parent=5 // pred_fallthru
      _
    %p199 = scmp.le.s32.totalorder 2, %s8
    // Predicated region
    $region33: #{tpu_custom_call.1} parent=5 // pred_check
      %p200 = pneg %p199
    $region34: #{tpu_custom_call.1} parent=5 // pred_check_branch
      %202 = sbr.rel (%p200) target = $region36
    $region35: #{tpu_custom_call.1} parent=5 // pred_region
      %s203 = ssub.s32 %s8, 2
      // Predicated region
      $region37: #{tpu_custom_call.1} parent=35 // pred_check
        %p204 = pneg %p89
      $region38: #{tpu_custom_call.1} parent=35 // pred_check_branch
        %206 = sbr.rel (%p204) target = $region40
      $region39: #{tpu_custom_call.1} parent=35 // pred_region
        %p207 = scmp.lt.s32.totalorder %s14, 1
        %s208 = scalar_select %p207, %s14, 1
        %s209 = smul.addr %s208, 8
        %s210 = scalar_lea.vmem %s2, %s209
      $region40: #{tpu_custom_call.1} parent=35 // pred_fallthru
        _
    $region36: #{tpu_custom_call.1} parent=5 // pred_fallthru
      _
  $region6: #{tpu_custom_call.1} parent=0 // loop_footer
    %s12 = sadd.s32 1, %s8
  $region7: #{tpu_custom_call.1} parent=0 // loop_footer_branch
    %7 = sbr.rel target = $region3
  $region8: #{tpu_custom_call.1} parent=0 // loop_exit
    _

</llo_original>
